<compile_context>
chip_gen: v7x
topology: tpu7x:2x2x1
jax: 0.10.0
libtpu: 0.0.40
codegen_flags: <defaults>
</compile_context>

<pallas_src>
import numpy as np
import jax
import jax.numpy as jnp
from jax.experimental import pallas as pl
from jax.experimental.pallas import tpu as pltpu

KSIZE = 3
EPS = 1e-5
PAD_LO = 8   # sublane-aligned row offset of the interior in the padded scratch


# ----------------------------------------------------------------------------
# Kernel
# ----------------------------------------------------------------------------
def _residual_block_kernel(x_ref, bw1_ref, g1_ref, be1_ref,
                           bw2_ref, g2_ref, be2_ref, gsum_ref,
                           out_ref, pad_ref):
    N, _, WC = pad_ref.shape
    NH = x_ref.shape[0]
    H = NH // N

    def conv3x3(v, bw_ref):
        # v: (NH, WC).  Store the interior at a sublane-aligned offset (full
        # unmasked lane-dense stores), then build the three kh taps from the
        # loaded padded value, concatenate them along lanes and run ONE
        # K = 3*WC MXU matmul.  The kw taps, the channel contraction and the
        # W-direction zero padding are all folded into the banded weight.
        pad_ref[:, PAD_LO:PAD_LO + H, :] = v.reshape(N, H, WC)
        pad = pad_ref[...]
        taps = [pad[:, PAD_LO - 1 + kh:PAD_LO - 1 + kh + H, :].reshape(NH, WC)
                for kh in range(KSIZE)]
        op = jnp.concatenate(taps, axis=1)                   # (NH, 3*WC)
        return jnp.dot(op, bw_ref[...],
                       preferred_element_type=jnp.float32)   # (NH, WC)

    def bn_relu(acc, gamma, beta):
        # Single pass over acc: partial sums / sums-of-squares, stacked into a
        # (16, WC) operand; one matmul against the inv_count-prescaled 0/1
        # group-sum matrix folds the W lane-groups and broadcasts per-channel
        # mean / E[x^2] back into the (1, W*C) lane layout.
        accp = acc.reshape(NH // 8, 8, WC)
        s1 = jnp.sum(accp, axis=0)                           # (8, WC)
        s2 = jnp.sum(accp * accp, axis=0)                    # (8, WC)
        stats = jnp.dot(jnp.concatenate([s1, s2], axis=0), gsum_ref[...],
                        preferred_element_type=jnp.float32)  # (16, WC)
        mean = jnp.sum(stats[0:8], axis=0, keepdims=True)    # (1, WC)
        ex2 = jnp.sum(stats[8:16], axis=0, keepdims=True)    # (1, WC)
        var = ex2 - mean * mean                              # E[x^2] - E[x]^2
        scale = gamma * jax.lax.rsqrt(var + EPS)
        shift = beta - mean * scale
        return jnp.maximum(acc * scale + shift, 0.0)         # (NH, WC)

    # Zero only the 1-row halo of the shared padded scratch (reused by both convs).
    zrow = jnp.zeros((N, 1, WC), jnp.float32)
    pad_ref[:, PAD_LO - 1:PAD_LO, :] = zrow
    pad_ref[:, PAD_LO + H:PAD_LO + H + 1, :] = zrow

    x = x_ref[...]                                           # (NH, WC)

    # conv -> BN -> ReLU, twice (conv bias omitted: cancelled exactly by BN).
    h1 = bn_relu(conv3x3(x, bw1_ref), g1_ref[...], be1_ref[...])
    h2 = bn_relu(conv3x3(h1, bw2_ref), g2_ref[...], be2_ref[...])

    # residual add, full-width lane-dense store
    out_ref[...] = x + h2


# ----------------------------------------------------------------------------
# Wrapper
# ----------------------------------------------------------------------------
@jax.jit
def residual_block(x_nchw, params):
    """x_nchw: (N, C, H, W) float32.  Returns (N, C, H, W)."""
    bw1, g1, be1, bw2, g2, be2, gsum = params
    N, C, H, W = x_nchw.shape
    WC = W * C
    assert WC % 128 == 0, "lane dim (W*C) should be a multiple of 128"
    assert H % 8 == 0 and (N * H) % 8 == 0, "H (and N*H) must be multiples of 8"

    # Lane-dense layout: channels live inside the 128-lane last dim.
    x_lane = jnp.transpose(x_nchw.astype(jnp.float32), (0, 2, 3, 1)).reshape(N * H, WC)
    # TODO(synk): in a multi-block network keep this (N*H, W*C) layout as the
    # persistent activation format so the NCHW<->lane transposes disappear.
    # TODO(synk): for v7x-scale problems add a grid over H-row bands
    # (dimension_semantics=("parallel",...), two-pass BN with per-band partial
    # sums), K-tile the banded weights and set vmem_limit_bytes explicitly; a
    # single VMEM-resident call is both simplest and fastest at demo shapes.
    # TODO(synk): for large W the tridiagonal band wastes ~(1-3/W) of MXU FLOPs;
    # switch to a channel-in-lane mapping or W-tiling when throughput-bound.

    vmem = pl.BlockSpec(memory_space=pltpu.MemorySpace.VMEM)
    out = pl.pallas_call(
        _residual_block_kernel,
        out_shape=jax.ShapeDtypeStruct((N * H, WC), jnp.float32),
        in_specs=[vmem] * 8,
        out_specs=vmem,
        scratch_shapes=[pltpu.VMEM((N, PAD_LO + H + 8, WC), jnp.float32)],
    )(x_lane, bw1, g1, be1, bw2, g2, be2, gsum)

    return jnp.transpose(out.reshape(N, H, W, C), (0, 3, 1, 2))


# ----------------------------------------------------------------------------
# Host-side parameter preparation
# ----------------------------------------------------------------------------
def _banded_weight_fused(w_oihw, width):
    """OIHW (Cout, Cin, 3, 3) -> (3*W*Cin, W*Cout) kh-stacked banded weight.

    Row block kh*W*Cin + wi*Cin, column block wo*Cout holds w[:, :, kh, kw]^T
    with kw = wi - wo + 1 when |wi - wo| <= 1; the missing boundary blocks
    implement the conv's zero padding along W.  The kh stacking matches the
    lane-concatenated (prev | cur | next) conv operand.
    """
    w = np.asarray(w_oihw, np.float32)
    Cout, Cin, KH, KW = w.shape
    wk = np.transpose(w, (2, 3, 1, 0))                       # (KH, KW, Cin, Cout)
    WCin = width * Cin
    bw = np.zeros((KH * WCin, width * Cout), np.float32)
    for kh in range(KH):
        for kw in range(KW):
            dw = kw - KW // 2
            for wo in range(width):
                wi = wo + dw
                if 0 <= wi < width:
                    bw[kh * WCin + wi * Cin:kh * WCin + (wi + 1) * Cin,
                       wo * Cout:(wo + 1) * Cout] = wk[kh, kw]
    return jnp.asarray(bw)


def _group_sum_matrix(width, channels, scale):
    """(W*C, W*C) scaled 0/1 matrix: folds W lane-groups into per-channel sums
    (times `scale`) and broadcasts them back to every W position in one matmul."""
    return jnp.asarray(scale * np.tile(np.eye(channels, dtype=np.float32),
                                       (width, width)))


def make_raw_params(key, in_channels, inter_channels):
    assert in_channels == inter_channels, \
        "PyTorch module only runs when in_channels == inter_channels"
    ks = jax.random.split(key, 8)
    w1 = 0.1 * jax.random.normal(ks[0], (inter_channels, in_channels, KSIZE, KSIZE), jnp.float32)
    b1 = 0.1 * jax.random.normal(ks[1], (inter_channels,), jnp.float32)
    g1 = 1.0 + 0.1 * jax.random.normal(ks[2], (inter_channels,), jnp.float32)
    be1 = 0.1 * jax.random.normal(ks[3], (inter_channels,), jnp.float32)
    w2 = 0.1 * jax.random.normal(ks[4], (in_channels, inter_channels, KSIZE, KSIZE), jnp.float32)
    b2 = 0.1 * jax.random.normal(ks[5], (in_channels,), jnp.float32)
    g2 = 1.0 + 0.1 * jax.random.normal(ks[6], (in_channels,), jnp.float32)
    be2 = 0.1 * jax.random.normal(ks[7], (in_channels,), jnp.float32)
    return (w1, b1, g1, be1, w2, b2, g2, be2)


def prepare_kernel_params(raw_params, batch, height, width):
    """Bake conv weights into banded slabs, BN affines into lane layout, and
    the BN normalization 1/(N*H*W) into the group-sum matrix (host-side, once).
    Conv biases are intentionally dropped: training-mode BN cancels them exactly."""
    w1, _b1, g1, be1, w2, _b2, g2, be2 = raw_params
    channels = w1.shape[1]

    def tile_lane(v):  # per-channel (C,) -> lane layout (1, W*C)
        return jnp.tile(v, width).reshape(1, width * v.shape[0])

    inv_count = 1.0 / float(batch * height * width)
    return (_banded_weight_fused(w1, width), tile_lane(g1), tile_lane(be1),
            _banded_weight_fused(w2, width), tile_lane(g2), tile_lane(be2),
            _group_sum_matrix(width, channels, inv_count))


# ----------------------------------------------------------------------------
# Pure-JAX reference (training-mode BatchNorm) for validation
# ----------------------------------------------------------------------------
def reference_forward(x_nchw, raw_params):
    w1, b1, g1, be1, w2, b2, g2, be2 = raw_params

    def conv(x, w, b):
        y = jax.lax.conv_general_dilated(
            x, w, window_strides=(1, 1), padding="SAME",
            dimension_numbers=("NCHW", "OIHW", "NCHW"))
        return y + b.reshape(1, -1, 1, 1)

    def bn_relu(x, g, be):
        m = jnp.mean(x, axis=(0, 2, 3), keepdims=True)
        v = jnp.mean((x - m) ** 2, axis=(0, 2, 3), keepdims=True)
        y = (x - m) * jax.lax.rsqrt(v + EPS) * g.reshape(1, -1, 1, 1) + be.reshape(1, -1, 1, 1)
        return jnp.maximum(y, 0.0)

    out1 = bn_relu(conv(x_nchw, w1, b1), g1, be1)
    out2 = bn_relu(conv(out1, w2, b2), g2, be2)
    return x_nchw + out2


if __name__ == "__main__":
    key = jax.random.PRNGKey(0)
    kx, kp = jax.random.split(key)

    N, C, H, W = 2, 8, 16, 16          # in_channels == inter_channels == 8, W*C = 128
    x = jax.random.normal(kx, (N, C, H, W), jnp.float32)

    raw_params = make_raw_params(kp, in_channels=C, inter_channels=C)
    params = prepare_kernel_params(raw_params, batch=N, height=H, width=W)

    out = jax.block_until_ready(residual_block(x, params))

    ref = reference_forward(x, raw_params)
    assert out.shape == (N, C, H, W)
    err = jnp.max(jnp.abs(out - ref))
    assert jnp.allclose(out, ref, atol=1e-4, rtol=1e-4), f"max abs err {err}"

    print("KERNEL_OK")
</pallas_src>

<mosaic_0001>
module attributes {stable_mosaic.version = 11 : i64} {
  func.func @_residual_block_kernel(%arg0: memref<32x128xf32, #tpu.memory_space<vmem>>, %arg1: memref<384x128xf32, #tpu.memory_space<vmem>>, %arg2: memref<1x128xf32, #tpu.memory_space<vmem>>, %arg3: memref<1x128xf32, #tpu.memory_space<vmem>>, %arg4: memref<384x128xf32, #tpu.memory_space<vmem>>, %arg5: memref<1x128xf32, #tpu.memory_space<vmem>>, %arg6: memref<1x128xf32, #tpu.memory_space<vmem>>, %arg7: memref<128x128xf32, #tpu.memory_space<vmem>>, %arg8: memref<32x128xf32, #tpu.memory_space<vmem>>, %arg9: memref<2x32x128xf32, #tpu.memory_space<vmem>>) attributes {dimension_semantics = [], scalar_prefetch = 0 : i64, scratch_operands = 1 : i64, tpu.core_type = #tpu.core_type<tc>} {
    %cst = arith.constant 0.000000e+00 : f32
    %0 = vector.broadcast %cst : f32 to vector<2x1x128xf32>
    %c0 = arith.constant 0 : index
    %c7 = arith.constant 7 : index
    %c0_0 = arith.constant 0 : index
    %1 = vector.load %arg9[%c0, %c7, %c0_0] : memref<2x32x128xf32, #tpu.memory_space<vmem>>, vector<2x1x128xf32>
    tpu.vector_store %arg9[%c0, %c7, %c0_0], %0 {strides = array<i32>} : memref<2x32x128xf32, #tpu.memory_space<vmem>>, vector<2x1x128xf32>,
    %c0_1 = arith.constant 0 : index
    %c24 = arith.constant 24 : index
    %c0_2 = arith.constant 0 : index
    %2 = vector.load %arg9[%c0_1, %c24, %c0_2] : memref<2x32x128xf32, #tpu.memory_space<vmem>>, vector<2x1x128xf32>
    tpu.vector_store %arg9[%c0_1, %c24, %c0_2], %0 {strides = array<i32>} : memref<2x32x128xf32, #tpu.memory_space<vmem>>, vector<2x1x128xf32>,
    %c0_3 = arith.constant 0 : index
    %c0_4 = arith.constant 0 : index
    %3 = vector.load %arg0[%c0_3, %c0_4] : memref<32x128xf32, #tpu.memory_space<vmem>>, vector<32x128xf32>
    %4 = vector.shape_cast %3 : vector<32x128xf32> to vector<2x16x128xf32>
    %c0_5 = arith.constant 0 : index
    %c8 = arith.constant 8 : index
    %c0_6 = arith.constant 0 : index
    %5 = vector.load %arg9[%c0_5, %c8, %c0_6] : memref<2x32x128xf32, #tpu.memory_space<vmem>>, vector<2x16x128xf32>
    tpu.vector_store %arg9[%c0_5, %c8, %c0_6], %4 {strides = array<i32>} : memref<2x32x128xf32, #tpu.memory_space<vmem>>, vector<2x16x128xf32>,
    %c0_7 = arith.constant 0 : index
    %c0_8 = arith.constant 0 : index
    %c0_9 = arith.constant 0 : index
    %6 = vector.load %arg9[%c0_7, %c0_8, %c0_9] : memref<2x32x128xf32, #tpu.memory_space<vmem>>, vector<2x32x128xf32>
    %7 = vector.extract_strided_slice %6 {offsets = [0, 7, 0], sizes = [2, 16, 128], strides = [1, 1, 1]} : vector<2x32x128xf32> to vector<2x16x128xf32>
    %8 = vector.shape_cast %7 : vector<2x16x128xf32> to vector<32x128xf32>
    %9 = vector.extract_strided_slice %6 {offsets = [0, 8, 0], sizes = [2, 16, 128], strides = [1, 1, 1]} : vector<2x32x128xf32> to vector<2x16x128xf32>
    %10 = vector.shape_cast %9 : vector<2x16x128xf32> to vector<32x128xf32>
    %11 = vector.extract_strided_slice %6 {offsets = [0, 9, 0], sizes = [2, 16, 128], strides = [1, 1, 1]} : vector<2x32x128xf32> to vector<2x16x128xf32>
    %12 = vector.shape_cast %11 : vector<2x16x128xf32> to vector<32x128xf32>
    %13 = tpu.concatenate %8, %10, %12 in 1 : vector<32x128xf32>, vector<32x128xf32>, vector<32x128xf32> -> vector<32x384xf32>
    %c0_10 = arith.constant 0 : index
    %c0_11 = arith.constant 0 : index
    %14 = vector.load %arg1[%c0_10, %c0_11] : memref<384x128xf32, #tpu.memory_space<vmem>>, vector<384x128xf32>
    %cst_12 = arith.constant dense<0.000000e+00> : vector<32x128xf32>
    %15 = tpu.matmul %13, %14, %cst_12 {dimension_numbers = #tpu.dot_dimension_numbers<[1], [0], [0], [1], [0, 0, 1, 1], [], []>} : vector<32x384xf32>, vector<384x128xf32>, vector<32x128xf32> -> vector<32x128xf32>
    %c0_13 = arith.constant 0 : index
    %c0_14 = arith.constant 0 : index
    %16 = vector.load %arg2[%c0_13, %c0_14] : memref<1x128xf32, #tpu.memory_space<vmem>>, vector<1x128xf32>
    %c0_15 = arith.constant 0 : index
    %c0_16 = arith.constant 0 : index
    %17 = vector.load %arg3[%c0_15, %c0_16] : memref<1x128xf32, #tpu.memory_space<vmem>>, vector<1x128xf32>
    %18 = vector.shape_cast %15 : vector<32x128xf32> to vector<4x8x128xf32>
    %cst_17 = arith.constant dense<0.000000e+00> : vector<8x128xf32>
    %19 = vector.multi_reduction <add>, %18, %cst_17 [0] : vector<4x8x128xf32> to vector<8x128xf32>
    %20 = arith.mulf %18, %18 : vector<4x8x128xf32>
    %cst_18 = arith.constant dense<0.000000e+00> : vector<8x128xf32>
    %21 = vector.multi_reduction <add>, %20, %cst_18 [0] : vector<4x8x128xf32> to vector<8x128xf32>
    %22 = tpu.concatenate %19, %21 in 0 : vector<8x128xf32>, vector<8x128xf32> -> vector<16x128xf32>
    %c0_19 = arith.constant 0 : index
    %c0_20 = arith.constant 0 : index
    %23 = vector.load %arg7[%c0_19, %c0_20] : memref<128x128xf32, #tpu.memory_space<vmem>>, vector<128x128xf32>
    %cst_21 = arith.constant dense<0.000000e+00> : vector<16x128xf32>
    %24 = tpu.matmul %22, %23, %cst_21 {dimension_numbers = #tpu.dot_dimension_numbers<[1], [0], [0], [1], [0, 0, 1, 1], [], []>} : vector<16x128xf32>, vector<128x128xf32>, vector<16x128xf32> -> vector<16x128xf32>
    %25 = vector.extract_strided_slice %24 {offsets = [0, 0], sizes = [8, 128], strides = [1, 1]} : vector<16x128xf32> to vector<8x128xf32>
    %cst_22 = arith.constant dense<0.000000e+00> : vector<128xf32>
    %26 = vector.multi_reduction <add>, %25, %cst_22 [0] : vector<8x128xf32> to vector<128xf32>
    %27 = vector.shape_cast %26 : vector<128xf32> to vector<1x128xf32>
    %28 = vector.extract_strided_slice %24 {offsets = [8, 0], sizes = [8, 128], strides = [1, 1]} : vector<16x128xf32> to vector<8x128xf32>
    %cst_23 = arith.constant dense<0.000000e+00> : vector<128xf32>
    %29 = vector.multi_reduction <add>, %28, %cst_23 [0] : vector<8x128xf32> to vector<128xf32>
    %30 = vector.shape_cast %29 : vector<128xf32> to vector<1x128xf32>
    %31 = arith.mulf %27, %27 : vector<1x128xf32>
    %32 = arith.subf %30, %31 : vector<1x128xf32>
    %cst_24 = arith.constant 9.99999974E-6 : f32
    %33 = vector.broadcast %cst_24 : f32 to vector<1x128xf32>
    %34 = arith.addf %32, %33 : vector<1x128xf32>
    %35 = math.rsqrt %34 : vector<1x128xf32>
    %36 = arith.mulf %16, %35 : vector<1x128xf32>
    %37 = arith.mulf %27, %36 : vector<1x128xf32>
    %38 = arith.subf %17, %37 : vector<1x128xf32>
    %39 = vector.broadcast %36 : vector<1x128xf32> to vector<32x128xf32>
    %40 = arith.mulf %15, %39 : vector<32x128xf32>
    %41 = vector.broadcast %38 : vector<1x128xf32> to vector<32x128xf32>
    %42 = arith.addf %40, %41 : vector<32x128xf32>
    %cst_25 = arith.constant 0.000000e+00 : f32
    %43 = vector.broadcast %cst_25 : f32 to vector<32x128xf32>
    %44 = arith.maximumf %42, %43 : vector<32x128xf32>
    %45 = vector.shape_cast %44 : vector<32x128xf32> to vector<2x16x128xf32>
    %c0_26 = arith.constant 0 : index
    %c8_27 = arith.constant 8 : index
    %c0_28 = arith.constant 0 : index
    %46 = vector.load %arg9[%c0_26, %c8_27, %c0_28] : memref<2x32x128xf32, #tpu.memory_space<vmem>>, vector<2x16x128xf32>
    tpu.vector_store %arg9[%c0_26, %c8_27, %c0_28], %45 {strides = array<i32>} : memref<2x32x128xf32, #tpu.memory_space<vmem>>, vector<2x16x128xf32>,
    %c0_29 = arith.constant 0 : index
    %c0_30 = arith.constant 0 : index
    %c0_31 = arith.constant 0 : index
    %47 = vector.load %arg9[%c0_29, %c0_30, %c0_31] : memref<2x32x128xf32, #tpu.memory_space<vmem>>, vector<2x32x128xf32>
    %48 = vector.extract_strided_slice %47 {offsets = [0, 7, 0], sizes = [2, 16, 128], strides = [1, 1, 1]} : vector<2x32x128xf32> to vector<2x16x128xf32>
    %49 = vector.shape_cast %48 : vector<2x16x128xf32> to vector<32x128xf32>
    %50 = vector.extract_strided_slice %47 {offsets = [0, 8, 0], sizes = [2, 16, 128], strides = [1, 1, 1]} : vector<2x32x128xf32> to vector<2x16x128xf32>
    %51 = vector.shape_cast %50 : vector<2x16x128xf32> to vector<32x128xf32>
    %52 = vector.extract_strided_slice %47 {offsets = [0, 9, 0], sizes = [2, 16, 128], strides = [1, 1, 1]} : vector<2x32x128xf32> to vector<2x16x128xf32>
    %53 = vector.shape_cast %52 : vector<2x16x128xf32> to vector<32x128xf32>
    %54 = tpu.concatenate %49, %51, %53 in 1 : vector<32x128xf32>, vector<32x128xf32>, vector<32x128xf32> -> vector<32x384xf32>
    %c0_32 = arith.constant 0 : index
    %c0_33 = arith.constant 0 : index
    %55 = vector.load %arg4[%c0_32, %c0_33] : memref<384x128xf32, #tpu.memory_space<vmem>>, vector<384x128xf32>
    %cst_34 = arith.constant dense<0.000000e+00> : vector<32x128xf32>
    %56 = tpu.matmul %54, %55, %cst_34 {dimension_numbers = #tpu.dot_dimension_numbers<[1], [0], [0], [1], [0, 0, 1, 1], [], []>} : vector<32x384xf32>, vector<384x128xf32>, vector<32x128xf32> -> vector<32x128xf32>
    %c0_35 = arith.constant 0 : index
    %c0_36 = arith.constant 0 : index
    %57 = vector.load %arg5[%c0_35, %c0_36] : memref<1x128xf32, #tpu.memory_space<vmem>>, vector<1x128xf32>
    %c0_37 = arith.constant 0 : index
    %c0_38 = arith.constant 0 : index
    %58 = vector.load %arg6[%c0_37, %c0_38] : memref<1x128xf32, #tpu.memory_space<vmem>>, vector<1x128xf32>
    %59 = vector.shape_cast %56 : vector<32x128xf32> to vector<4x8x128xf32>
    %cst_39 = arith.constant dense<0.000000e+00> : vector<8x128xf32>
    %60 = vector.multi_reduction <add>, %59, %cst_39 [0] : vector<4x8x128xf32> to vector<8x128xf32>
    %61 = arith.mulf %59, %59 : vector<4x8x128xf32>
    %cst_40 = arith.constant dense<0.000000e+00> : vector<8x128xf32>
    %62 = vector.multi_reduction <add>, %61, %cst_40 [0] : vector<4x8x128xf32> to vector<8x128xf32>
    %63 = tpu.concatenate %60, %62 in 0 : vector<8x128xf32>, vector<8x128xf32> -> vector<16x128xf32>
    %c0_41 = arith.constant 0 : index
    %c0_42 = arith.constant 0 : index
    %64 = vector.load %arg7[%c0_41, %c0_42] : memref<128x128xf32, #tpu.memory_space<vmem>>, vector<128x128xf32>
    %cst_43 = arith.constant dense<0.000000e+00> : vector<16x128xf32>
    %65 = tpu.matmul %63, %64, %cst_43 {dimension_numbers = #tpu.dot_dimension_numbers<[1], [0], [0], [1], [0, 0, 1, 1], [], []>} : vector<16x128xf32>, vector<128x128xf32>, vector<16x128xf32> -> vector<16x128xf32>
    %66 = vector.extract_strided_slice %65 {offsets = [0, 0], sizes = [8, 128], strides = [1, 1]} : vector<16x128xf32> to vector<8x128xf32>
    %cst_44 = arith.constant dense<0.000000e+00> : vector<128xf32>
    %67 = vector.multi_reduction <add>, %66, %cst_44 [0] : vector<8x128xf32> to vector<128xf32>
    %68 = vector.shape_cast %67 : vector<128xf32> to vector<1x128xf32>
    %69 = vector.extract_strided_slice %65 {offsets = [8, 0], sizes = [8, 128], strides = [1, 1]} : vector<16x128xf32> to vector<8x128xf32>
    %cst_45 = arith.constant dense<0.000000e+00> : vector<128xf32>
    %70 = vector.multi_reduction <add>, %69, %cst_45 [0] : vector<8x128xf32> to vector<128xf32>
    %71 = vector.shape_cast %70 : vector<128xf32> to vector<1x128xf32>
    %72 = arith.mulf %68, %68 : vector<1x128xf32>
    %73 = arith.subf %71, %72 : vector<1x128xf32>
    %cst_46 = arith.constant 9.99999974E-6 : f32
    %74 = vector.broadcast %cst_46 : f32 to vector<1x128xf32>
    %75 = arith.addf %73, %74 : vector<1x128xf32>
    %76 = math.rsqrt %75 : vector<1x128xf32>
    %77 = arith.mulf %57, %76 : vector<1x128xf32>
    %78 = arith.mulf %68, %77 : vector<1x128xf32>
    %79 = arith.subf %58, %78 : vector<1x128xf32>
    %80 = vector.broadcast %77 : vector<1x128xf32> to vector<32x128xf32>
    %81 = arith.mulf %56, %80 : vector<32x128xf32>
    %82 = vector.broadcast %79 : vector<1x128xf32> to vector<32x128xf32>
    %83 = arith.addf %81, %82 : vector<32x128xf32>
    %cst_47 = arith.constant 0.000000e+00 : f32
    %84 = vector.broadcast %cst_47 : f32 to vector<32x128xf32>
    %85 = arith.maximumf %83, %84 : vector<32x128xf32>
    %86 = arith.addf %3, %85 : vector<32x128xf32>
    %c0_48 = arith.constant 0 : index
    %c0_49 = arith.constant 0 : index
    %87 = vector.load %arg8[%c0_48, %c0_49] : memref<32x128xf32, #tpu.memory_space<vmem>>, vector<32x128xf32>
    tpu.vector_store %arg8[%c0_48, %c0_49], %86 {strides = array<i32>} : memref<32x128xf32, #tpu.memory_space<vmem>>, vector<32x128xf32>,
    return
  }
}

</mosaic_0001>

<llo_original>
// kernel: residual_block.1
$region0: #{residual_block.1}
  #allocation0 [shape = 'u32[]', space=smem, size = 0x4, offset = 0x4, fixed_abs, tag = 'smem constant byte address 0x4 - core index']
  #allocation1 [shape = 'u32[144,128]{1,0:T(1,128)}', space=vmem, size = 0x12000, scoped, tag = 'internal scratch']
  #allocation2 [shape = 'f32[2,32,128]{2,1,0:T(8,128)}', space=vmem, size = 0x8000, scoped, tag = 'scratch operand']
  %s0 = inlined_call_operand.vmem [shape: f32[32,128], index: 0, kind: input, shape index: {}]
  %s1 = inlined_call_operand.vmem [shape: f32[384,128], index: 1, kind: input, shape index: {}]
  %s2 = inlined_call_operand.vmem [shape: f32[1,128], index: 2, kind: input, shape index: {}]
  %s3 = inlined_call_operand.vmem [shape: f32[1,128], index: 3, kind: input, shape index: {}]
  %s4 = inlined_call_operand.vmem [shape: f32[384,128], index: 4, kind: input, shape index: {}]
  %s5 = inlined_call_operand.vmem [shape: f32[1,128], index: 5, kind: input, shape index: {}]
  %s6 = inlined_call_operand.vmem [shape: f32[1,128], index: 6, kind: input, shape index: {}]
  %s7 = inlined_call_operand.vmem [shape: f32[128,128], index: 7, kind: input, shape index: {}]
  %s8 = inlined_call_operand.vmem [shape: f32[32,128], index: 8, kind: output, shape index: {}]
  %s9 = sld [smem:[#allocation0]]
  $region42: #{residual_block.1} parent=0
    _
  %s11 = ssub.s32 1, %s9
  %s12 = scalar_select 0, %s11, %s9
  // Predicated region
  $region2: #{residual_block.1} parent=0 // pred_check
    _
  $region3: #{residual_block.1} parent=0 // pred_check_branch
    %14 = sbr.rel (0) target = $region5
  $region4: #{residual_block.1} parent=0 // pred_region
    _
  $region5: #{residual_block.1} parent=0 // pred_fallthru
    _
  // Predicated region
  $region6: #{residual_block.1} parent=0 // pred_check
    _
  $region7: #{residual_block.1} parent=0 // pred_check_branch
    %16 = sbr.rel (0) target = $region9
  $region8: #{residual_block.1} parent=0 // pred_region
    _
  $region9: #{residual_block.1} parent=0 // pred_fallthru
    _
  // Predicated region
  $region10: #{residual_block.1} parent=0 // pred_check
    _
  $region11: #{residual_block.1} parent=0 // pred_check_branch
    %18 = sbr.rel (0) target = $region13
  $region12: #{residual_block.1} parent=0 // pred_region
    _
  $region13: #{residual_block.1} parent=0 // pred_fallthru
    _
  // Predicated region
  $region14: #{residual_block.1} parent=0 // pred_check
    _
  $region15: #{residual_block.1} parent=0 // pred_check_branch
    %20 = sbr.rel (0) target = $region17
  $region16: #{residual_block.1} parent=0 // pred_region
    _
  $region17: #{residual_block.1} parent=0 // pred_fallthru
    _
  // Predicated region
  $region18: #{residual_block.1} parent=0 // pred_check
    _
  $region19: #{residual_block.1} parent=0 // pred_check_branch
    %22 = sbr.rel (0) target = $region21
  $region20: #{residual_block.1} parent=0 // pred_region
    _
  $region21: #{residual_block.1} parent=0 // pred_fallthru
    _
  // Predicated region
  $region22: #{residual_block.1} parent=0 // pred_check
    _
  $region23: #{residual_block.1} parent=0 // pred_check_branch
    %24 = sbr.rel (0) target = $region25
  $region24: #{residual_block.1} parent=0 // pred_region
    _
  $region25: #{residual_block.1} parent=0 // pred_fallthru
    _
  // Predicated region
  $region26: #{residual_block.1} parent=0 // pred_check
    _
  $region27: #{residual_block.1} parent=0 // pred_check_branch
    %26 = sbr.rel (0) target = $region29
  $region28: #{residual_block.1} parent=0 // pred_region
    _
  $region29: #{residual_block.1} parent=0 // pred_fallthru
    _
  // Predicated region
  $region30: #{residual_block.1} parent=0 // pred_check
    _
  $region31: #{residual_block.1} parent=0 // pred_check_branch
    %28 = sbr.rel (0) target = $region33
  $region32: #{residual_block.1} parent=0 // pred_region
    _
  $region33: #{residual_block.1} parent=0 // pred_fallthru
    _
  %29 = vst [vmem:[#allocation2 + $0x7] sm:$0x1] 0.0
  %30 = vst [vmem:[#allocation2 + $0x27] sm:$0x1] 0.0
  %31 = vst [vmem:[#allocation2 + $0x18] sm:$0x1] 0.0
  %32 = vst [vmem:[#allocation2 + $0x38] sm:$0x1] 0.0
  %v33 = vld [vmem:[%s0] sm:$0xff]
  %v34 = vld [vmem:[%s0 + $0x8] sm:$0xff]
  %v35 = vld [vmem:[%s0 + $0x10] sm:$0xff]
  %v36 = vld [vmem:[%s0 + $0x18] sm:$0xff]
  %37 = vst [vmem:[#allocation2 + $0x8] sm:$0xff] %v33
  %38 = vst [vmem:[#allocation2 + $0x10] sm:$0xff] %v34
  %39 = vst [vmem:[#allocation2 + $0x28] sm:$0xff] %v35
  %40 = vst [vmem:[#allocation2 + $0x30] sm:$0xff] %v36
  %v41 = vld [vmem:[#allocation2] sm:$0xff]
  %v42 = vld [vmem:[#allocation2 + $0x8] sm:$0xff]
  %v43 = vld [vmem:[#allocation2 + $0x10] sm:$0xff]
  %v44 = vld [vmem:[#allocation2 + $0x18] sm:$0xff]
  %v45 = vld [vmem:[#allocation2 + $0x20] sm:$0xff]
  %v46 = vld [vmem:[#allocation2 + $0x28] sm:$0xff]
  %v47 = vld [vmem:[#allocation2 + $0x30] sm:$0xff]
  %v48 = vld [vmem:[#allocation2 + $0x38] sm:$0xff]
  %vm55 = vcmask 1040384
  %v56 = vrot.slane %v41, 7
  %v57 = vrot.slane %v42, 7
  %v58 = vsel %vm55, %v56, %v57
  %v59 = vrot.slane %v43, 7
  %v60 = vsel %vm55, %v57, %v59
  %v61 = vrot.slane %v45, 7
  %v62 = vrot.slane %v46, 7
  %v63 = vsel %vm55, %v61, %v62
  %v64 = vrot.slane %v47, 7
  %v65 = vsel %vm55, %v62, %v64
  %vm72 = vcmask 1046528
  %v73 = vrot.slane %v42, 1
  %v74 = vrot.slane %v43, 1
  %v75 = vsel %vm72, %v73, %v74
  %v76 = vrot.slane %v44, 1
  %v77 = vsel %vm72, %v74, %v76
  %v78 = vrot.slane %v46, 1
  %v79 = vrot.slane %v47, 1
  %v80 = vsel %vm72, %v78, %v79
  %v81 = vrot.slane %v48, 1
  %v82 = vsel %vm72, %v79, %v81
  %v87 = vld [vmem:[%s1] sm:$0xff]
  %v88 = vld [vmem:[%s1 + $0x8] sm:$0xff]
  %v89 = vld [vmem:[%s1 + $0x10] sm:$0xff]
  %v90 = vld [vmem:[%s1 + $0x18] sm:$0xff]
  %v91 = vld [vmem:[%s1 + $0x20] sm:$0xff]
  %v92 = vld [vmem:[%s1 + $0x28] sm:$0xff]
  %v93 = vld [vmem:[%s1 + $0x30] sm:$0xff]
  %v94 = vld [vmem:[%s1 + $0x38] sm:$0xff]
  %v95 = vld [vmem:[%s1 + $0x40] sm:$0xff]
  %v96 = vld [vmem:[%s1 + $0x48] sm:$0xff]
  %v97 = vld [vmem:[%s1 + $0x50] sm:$0xff]
  %v98 = vld [vmem:[%s1 + $0x58] sm:$0xff]
  %v99 = vld [vmem:[%s1 + $0x60] sm:$0xff]
  %v100 = vld [vmem:[%s1 + $0x68] sm:$0xff]
  %v101 = vld [vmem:[%s1 + $0x70] sm:$0xff]
  %v102 = vld [vmem:[%s1 + $0x78] sm:$0xff]
  %v103 = vld [vmem:[%s1 + $0x80] sm:$0xff]
  %v104 = vld [vmem:[%s1 + $0x88] sm:$0xff]
  %v105 = vld [vmem:[%s1 + $0x90] sm:$0xff]
  %v106 = vld [vmem:[%s1 + $0x98] sm:$0xff]
  %v107 = vld [vmem:[%s1 + $0xa0] sm:$0xff]
  %v108 = vld [vmem:[%s1 + $0xa8] sm:$0xff]
  %v109 = vld [vmem:[%s1 + $0xb0] sm:$0xff]
  %v110 = vld [vmem:[%s1 + $0xb8] sm:$0xff]
  %v111 = vld [vmem:[%s1 + $0xc0] sm:$0xff]
  %v112 = vld [vmem:[%s1 + $0xc8] sm:$0xff]
  %v113 = vld [vmem:[%s1 + $0xd0] sm:$0xff]
  %v114 = vld [vmem:[%s1 + $0xd8] sm:$0xff]
  %v115 = vld [vmem:[%s1 + $0xe0] sm:$0xff]
  %v116 = vld [vmem:[%s1 + $0xe8] sm:$0xff]
  %v117 = vld [vmem:[%s1 + $0xf0] sm:$0xff]
  %v118 = vld [vmem:[%s1 + $0xf8] sm:$0xff]
  %v119 = vld [vmem:[%s1 + $0x100] sm:$0xff]
  %v120 = vld [vmem:[%s1 + $0x108] sm:$0xff]
  %v121 = vld [vmem:[%s1 + $0x110] sm:$0xff]
  %v122 = vld [vmem:[%s1 + $0x118] sm:$0xff]
  %v123 = vld [vmem:[%s1 + $0x120] sm:$0xff]
  %v124 = vld [vmem:[%s1 + $0x128] sm:$0xff]
  %v125 = vld [vmem:[%s1 + $0x130] sm:$0xff]
  %v126 = vld [vmem:[%s1 + $0x138] sm:$0xff]
  %v127 = vld [vmem:[%s1 + $0x140] sm:$0xff]
  %v128 = vld [vmem:[%s1 + $0x148] sm:$0xff]
  %v129 = vld [vmem:[%s1 + $0x150] sm:$0xff]
  %v130 = vld [vmem:[%s1 + $0x158] sm:$0xff]
  %v131 = vld [vmem:[%s1 + $0x160] sm:$0xff]
  %v132 = vld [vmem:[%s1 + $0x168] sm:$0xff]
  %v133 = vld [vmem:[%s1 + $0x170] sm:$0xff]
  %v134 = vld [vmem:[%s1 + $0x178] sm:$0xff]
  %135 = vmatprep.subr.mxu0 0.0
  %136 = vmatpush1.msra.mxu0 %v87
  %137 = vmatprep.subr.mxu0 0.0
  %138 = vmatpush1.msra.mxu0 %v88
  %139 = vmatprep.subr.mxu0 0.0
  %140 = vmatpush1.msra.mxu0 %v89
  %141 = vmatprep.subr.mxu0 0.0
  %142 = vmatpush1.msra.mxu0 %v90
  %143 = vmatprep.subr.mxu0 0.0
  %144 = vmatpush1.msra.mxu0 %v91
  %145 = vmatprep.subr.mxu0 0.0
  %146 = vmatpush1.msra.mxu0 %v92
  %147 = vmatprep.subr.mxu0 0.0
  %148 = vmatpush1.msra.mxu0 %v93
  %149 = vmatprep.subr.mxu0 0.0
  %150 = vmatpush1.msra.mxu0 %v94
  %151 = vmatprep.subr.mxu0 0.0
  %152 = vmatpush1.msra.mxu0 %v95
  %153 = vmatprep.subr.mxu0 0.0
  %154 = vmatpush1.msra.mxu0 %v96
  %155 = vmatprep.subr.mxu0 0.0
  %156 = vmatpush1.msra.mxu0 %v97
  %157 = vmatprep.subr.mxu0 0.0
  %158 = vmatpush1.msra.mxu0 %v98
  %159 = vmatprep.subr.mxu0 0.0
  %160 = vmatpush1.msra.mxu0 %v99
  %161 = vmatprep.subr.mxu0 0.0
  %162 = vmatpush1.msra.mxu0 %v100
  %163 = vmatprep.subr.mxu0 0.0
  %164 = vmatpush1.msra.mxu0 %v101
  %165 = vmatprep.subr.mxu0 0.0
  %166 = vmatpush1.msra.mxu0 %v102
  %167 = vmatprep.subr.mxu0 0.0
  %168 = vmatpush1.msra.mxu0 %v103
  %169 = vmatprep.subr.mxu0 0.0
  %170 = vmatpush1.msra.mxu0 %v104
  %171 = vmatprep.subr.mxu0 0.0
  %172 = vmatpush1.msra.mxu0 %v105
  %173 = vmatprep.subr.mxu0 0.0
  %174 = vmatpush1.msra.mxu0 %v106
  %175 = vmatprep.subr.mxu0 0.0
  %176 = vmatpush1.msra.mxu0 %v107
  %177 = vmatprep.subr.mxu0 0.0
  %178 = vmatpush1.msra.mxu0 %v108
  %179 = vmatprep.subr.mxu0 0.0
  %180 = vmatpush1.msra.mxu0 %v109
  %181 = vmatprep.subr.mxu0 0.0
  %182 = vmatpush1.msra.mxu0 %v110
  %183 = vmatprep.subr.mxu0 0.0
  %184 = vmatpush1.msra.mxu0 %v111
  %185 = vmatprep.subr.mxu0 0.0
  %186 = vmatpush1.msra.mxu0 %v112
  %187 = vmatprep.subr.mxu0 0.0
  %188 = vmatpush1.msra.mxu0 %v113
  %189 = vmatprep.subr.mxu0 0.0
  %190 = vmatpush1.msra.mxu0 %v114
  %191 = vmatprep.subr.mxu0 0.0
  %192 = vmatpush1.msra.mxu0 %v115
  %193 = vmatprep.subr.mxu0 0.0
  %194 = vmatpush1.msra.mxu0 %v116
  %195 = vmatprep.subr.mxu0 0.0
  %196 = vmatpush1.msra.mxu0 %v117
  %197 = vmatprep.subr.mxu0 0.0
  %198 = vmatpush1.msra.mxu0 %v118
  %199 = vmatprep.mubr.f32.mxu0 %v42
  %200 = vmatmul.mubr.f32.gmra.mrb[0].mxu0 %v58
  %v201 = vpop.f32.mrb[0].mxu0
  %v202 = vadd.f32 0.0, %v201
  %v203 = vpop.f32.mrb[0].mxu0
  %204 = vmatprep.mubr.f32.mxu0 %v43
  %205 = vmatmul.mubr.f32.gmra.mrb[0].mxu0 %v60
  %v206 = vpop.f32.mrb[0].mxu0
  %v207 = vadd.f32 0.0, %v206
  %v208 = vpop.f32.mrb[0].mxu0
  %209 = vmatprep.mubr.f32.mxu0 %v46
  %210 = vmatmul.mubr.f32.gmra.mrb[0].mxu0 %v63
  %v211 = vpop.f32.mrb[0].mxu0
  %v212 = vadd.f32 0.0, %v211
  %v213 = vpop.f32.mrb[0].mxu0
  %214 = vmatprep.mubr.f32.mxu0 %v47
  %215 = vmatmul.mubr.f32.gmra.mrb[0].mxu0 %v65
  %v216 = vpop.f32.mrb[0].mxu0
  %v217 = vadd.f32 0.0, %v216
  %v218 = vpop.f32.mrb[0].mxu0
  %219 = vdwg.mxu0
  %220 = vmatprep.subr.mxu0 0.0
  %221 = vmatpush1.msra.mxu0 %v119
  %222 = vmatprep.subr.mxu0 0.0
  %223 = vmatpush1.msra.mxu0 %v120
  %224 = vmatprep.subr.mxu0 0.0
  %225 = vmatpush1.msra.mxu0 %v121
  %226 = vmatprep.subr.mxu0 0.0
  %227 = vmatpush1.msra.mxu0 %v122
  %228 = vmatprep.subr.mxu0 0.0
  %229 = vmatpush1.msra.mxu0 %v123
  %230 = vmatprep.subr.mxu0 0.0
  %231 = vmatpush1.msra.mxu0 %v124
  %232 = vmatprep.subr.mxu0 0.0
  %233 = vmatpush1.msra.mxu0 %v125
  %234 = vmatprep.subr.mxu0 0.0
  %235 = vmatpush1.msra.mxu0 %v126
  %236 = vmatprep.subr.mxu0 0.0
  %237 = vmatpush1.msra.mxu0 %v127
  %238 = vmatprep.subr.mxu0 0.0
  %239 = vmatpush1.msra.mxu0 %v128
  %240 = vmatprep.subr.mxu0 0.0
  %241 = vmatpush1.msra.mxu0 %v129
  %242 = vmatprep.subr.mxu0 0.0
  %243 = vmatpush1.msra.mxu0 %v130
  %244 = vmatprep.subr.mxu0 0.0
  %245 = vmatpush1.msra.mxu0 %v131
  %246 = vmatprep.subr.mxu0 0.0
  %247 = vmatpush1.msra.mxu0 %v132
  %248 = vmatprep.subr.mxu0 0.0
  %249 = vmatpush1.msra.mxu0 %v133
  %250 = vmatprep.subr.mxu0 0.0
  %251 = vmatpush1.msra.mxu0 %v134
  %252 = vmatprep.subr.mxu0 0.0
  %253 = vmatpush1.msra.mxu0 0.0
  %254 = vmatprep.subr.mxu0 0.0
  %255 = vmatpush1.msra.mxu0 0.0
  %256 = vmatprep.subr.mxu0 0.0
  %257 = vmatpush1.msra.mxu0 0.0
  %258 = vmatprep.subr.mxu0 0.0
  %259 = vmatpush1.msra.mxu0 0.0
  %260 = vmatprep.subr.mxu0 0.0
  %261 = vmatpush1.msra.mxu0 0.0
  %262 = vmatprep.subr.mxu0 0.0
  %263 = vmatpush1.msra.mxu0 0.0
  %264 = vmatprep.subr.mxu0 0.0
  %265 = vmatpush1.msra.mxu0 0.0
  %266 = vmatprep.subr.mxu0 0.0
  %267 = vmatpush1.msra.mxu0 0.0
  %268 = vmatprep.subr.mxu0 0.0
  %269 = vmatpush1.msra.mxu0 0.0
  %270 = vmatprep.subr.mxu0 0.0
  %271 = vmatpush1.msra.mxu0 0.0
  %272 = vmatprep.subr.mxu0 0.0
  %273 = vmatpush1.msra.mxu0 0.0
  %274 = vmatprep.subr.mxu0 0.0
  %275 = vmatpush1.msra.mxu0 0.0
  %276 = vmatprep.subr.mxu0 0.0
  %277 = vmatpush1.msra.mxu0 0.0
  %278 = vmatprep.subr.mxu0 0.0
  %279 = vmatpush1.msra.mxu0 0.0
  %280 = vmatprep.subr.mxu0 0.0
  %281 = vmatpush1.msra.mxu0 0.0
  %282 = vmatprep.subr.mxu0 0.0
  %283 = vmatpush1.msra.mxu0 0.0
  %284 = vmatprep.mubr.f32.mxu0 0.0
  %285 = vmatmul.mubr.f32.gmra.mrb[0].mxu0 %v75
  %v286 = vpop.f32.mrb[0].mxu0
  %v287 = vadd.f32 %v202, %v286
  %v288 = vpop.f32.mrb[0].mxu0
  %289 = vmatprep.mubr.f32.mxu0 0.0
  %290 = vmatmul.mubr.f32.gmra.mrb[0].mxu0 %v77
  %v291 = vpop.f32.mrb[0].mxu0
  %v292 = vadd.f32 %v207, %v291
  %v293 = vpop.f32.mrb[0].mxu0
  %294 = vmatprep.mubr.f32.mxu0 0.0
  %295 = vmatmul.mubr.f32.gmra.mrb[0].mxu0 %v80
  %v296 = vpop.f32.mrb[0].mxu0
  %v297 = vadd.f32 %v212, %v296
  %v298 = vpop.f32.mrb[0].mxu0
  %299 = vmatprep.mubr.f32.mxu0 0.0
  %300 = vmatmul.mubr.f32.gmra.mrb[0].mxu0 %v82
  %v301 = vpop.f32.mrb[0].mxu0
  %v302 = vadd.f32 %v217, %v301
  %v303 = vpop.f32.mrb[0].mxu0
  %304 = vdwg.mxu0
  %v305 = vld [vmem:[%s2] sm:$0x1]
  %v306 = vld [vmem:[%s3] sm:$0x1]
  %v307 = vadd.f32 %v287, %v292
  %v308 = vadd.f32 %v307, %v297
  %v309 = vadd.f32 %v308, %v302
  %v310 = vmul.f32 %v287, %v287
  %v311 = vmul.f32 %v292, %v292
  %v312 = vmul.f32 %v297, %v297
  %v313 = vmul.f32 %v302, %v302
  %v314 = vadd.f32 %v310, %v311
  %v315 = vadd.f32 %v314, %v312
  %v316 = vadd.f32 %v315, %v313
  %v317 = vld [vmem:[%s7] sm:$0xff]
  %v318 = vld [vmem:[%s7 + $0x8] sm:$0xff]
  %v319 = vld [vmem:[%s7 + $0x10] sm:$0xff]
  %v320 = vld [vmem:[%s7 + $0x18] sm:$0xff]
  %v321 = vld [vmem:[%s7 + $0x20] sm:$0xff]
  %v322 = vld [vmem:[%s7 + $0x28] sm:$0xff]
  %v323 = vld [vmem:[%s7 + $0x30] sm:$0xff]
  %v324 = vld [vmem:[%s7 + $0x38] sm:$0xff]
  %v325 = vld [vmem:[%s7 + $0x40] sm:$0xff]
  %v326 = vld [vmem:[%s7 + $0x48] sm:$0xff]
  %v327 = vld [vmem:[%s7 + $0x50] sm:$0xff]
  %v328 = vld [vmem:[%s7 + $0x58] sm:$0xff]
  %v329 = vld [vmem:[%s7 + $0x60] sm:$0xff]
  %v330 = vld [vmem:[%s7 + $0x68] sm:$0xff]
  %v331 = vld [vmem:[%s7 + $0x70] sm:$0xff]
  %v332 = vld [vmem:[%s7 + $0x78] sm:$0xff]
  %333 = vmatprep.subr.mxu0 0.0
  %334 = vmatpush1.msra.mxu0 %v317
  %335 = vmatprep.subr.mxu0 0.0
  %336 = vmatpush1.msra.mxu0 %v318
  %337 = vmatprep.subr.mxu0 0.0
  %338 = vmatpush1.msra.mxu0 %v319
  %339 = vmatprep.subr.mxu0 0.0
  %340 = vmatpush1.msra.mxu0 %v320
  %341 = vmatprep.subr.mxu0 0.0
  %342 = vmatpush1.msra.mxu0 %v321
  %343 = vmatprep.subr.mxu0 0.0
  %344 = vmatpush1.msra.mxu0 %v322
  %345 = vmatprep.subr.mxu0 0.0
  %346 = vmatpush1.msra.mxu0 %v323
  %347 = vmatprep.subr.mxu0 0.0
  %348 = vmatpush1.msra.mxu0 %v324
  %349 = vmatprep.subr.mxu0 0.0
  %350 = vmatpush1.msra.mxu0 %v325
  %351 = vmatprep.subr.mxu0 0.0
  %352 = vmatpush1.msra.mxu0 %v326
  %353 = vmatprep.subr.mxu0 0.0
  %354 = vmatpush1.msra.mxu0 %v327
  %355 = vmatprep.subr.mxu0 0.0
  %356 = vmatpush1.msra.mxu0 %v328
  %357 = vmatprep.subr.mxu0 0.0
  %358 = vmatpush1.msra.mxu0 %v329
  %359 = vmatprep.subr.mxu0 0.0
  %360 = vmatpush1.msra.mxu0 %v330
  %361 = vmatprep.subr.mxu0 0.0
  %362 = vmatpush1.msra.mxu0 %v331
  %363 = vmatprep.subr.mxu0 0.0
  %364 = vmatpush1.msra.mxu0 %v332
  %365 = vmatprep.subr.mxu0 0.0
  %366 = vmatpush1.msra.mxu0 0.0
  %367 = vmatprep.subr.mxu0 0.0
  %368 = vmatpush1.msra.mxu0 0.0
  %369 = vmatprep.subr.mxu0 0.0
  %370 = vmatpush1.msra.mxu0 0.0
  %371 = vmatprep.subr.mxu0 0.0
  %372 = vmatpush1.msra.mxu0 0.0
  %373 = vmatprep.subr.mxu0 0.0
  %374 = vmatpush1.msra.mxu0 0.0
  %375 = vmatprep.subr.mxu0 0.0
  %376 = vmatpush1.msra.mxu0 0.0
  %377 = vmatprep.subr.mxu0 0.0
  %378 = vmatpush1.msra.mxu0 0.0
  %379 = vmatprep.subr.mxu0 0.0
  %380 = vmatpush1.msra.mxu0 0.0
  %381 = vmatprep.subr.mxu0 0.0
  %382 = vmatpush1.msra.mxu0 0.0
  %383 = vmatprep.subr.mxu0 0.0
  %384 = vmatpush1.msra.mxu0 0.0
  %385 = vmatprep.subr.mxu0 0.0
  %386 = vmatpush1.msra.mxu0 0.0
  %387 = vmatprep.subr.mxu0 0.0
  %388 = vmatpush1.msra.mxu0 0.0
  %389 = vmatprep.subr.mxu0 0.0
  %390 = vmatpush1.msra.mxu0 0.0
  %391 = vmatprep.subr.mxu0 0.0
  %392 = vmatpush1.msra.mxu0 0.0
  %393 = vmatprep.subr.mxu0 0.0
  %394 = vmatpush1.msra.mxu0 0.0
  %395 = vmatprep.subr.mxu0 0.0
  %396 = vmatpush1.msra.mxu0 0.0
  %397 = vmatprep.mubr.f32.mxu0 0.0
  %398 = vmatmul.mubr.f32.gmra.mrb[0].mxu0 %v309
  %v399 = vpop.f32.mrb[0].mxu0
  %v400 = vadd.f32 0.0, %v399
  %v401 = vpop.f32.mrb[0].mxu0
  %402 = vmatprep.mubr.f32.mxu0 0.0
  %403 = vmatmul.mubr.f32.gmra.mrb[0].mxu0 %v316
  %v404 = vpop.f32.mrb[0].mxu0
  %v405 = vadd.f32 0.0, %v404
  %v406 = vpop.f32.mrb[0].mxu0
  %407 = vdwg.mxu0
  %v408 = vrot.slane %v400, 4
  %v409 = vadd.f32 %v400, %v408
  %v410 = vrot.slane %v409, 2
  %v411 = vadd.f32 %v409, %v410
  %v412 = vrot.slane %v411, 1
  %v413 = vadd.f32 %v411, %v412
  %v414 = vrot.slane %v405, 4
  %v415 = vadd.f32 %v405, %v414
  %v416 = vrot.slane %v415, 2
  %v417 = vadd.f32 %v415, %v416
  %v418 = vrot.slane %v417, 1
  %v419 = vadd.f32 %v417, %v418
  %v420 = vmul.f32 %v413, %v413
  %v421 = vsub.f32 %v419, %v420
  %v422 = vadd.f32 %v421, 1e-05
  %v423 = vrsqrt.pop %v422
  %v424 = vmul.f32 %v305, %v423
  %v425 = vmul.f32 %v413, %v424
  %v426 = vsub.f32 %v306, %v425
  %v428 = vlaneseq
  %v429 = vshrl.u32 %v428, 7
  %v430 = vsub.s32 0, %v429
  %v431 = vrot.slane %v424, %v430
  %v433 = vmul.f32 %v287, %v431
  %v434 = vmul.f32 %v292, %v431
  %v435 = vmul.f32 %v297, %v431
  %v436 = vmul.f32 %v302, %v431
  %v438 = vlaneseq
  %v439 = vshrl.u32 %v438, 7
  %v440 = vsub.s32 0, %v439
  %v441 = vrot.slane %v426, %v440
  %v443 = vadd.f32 %v433, %v441
  %v444 = vadd.f32 %v434, %v441
  %v445 = vadd.f32 %v435, %v441
  %v446 = vadd.f32 %v436, %v441
  %v447 = vmax.f32 %v443, 0.0
  %v448 = vmax.f32 %v444, 0.0
  %v449 = vmax.f32 %v445, 0.0
  %v450 = vmax.f32 %v446, 0.0
  %451 = vst [vmem:[#allocation2 + $0x8] sm:$0xff] %v447
  %452 = vst [vmem:[#allocation2 + $0x10] sm:$0xff] %v448
  %453 = vst [vmem:[#allocation2 + $0x28] sm:$0xff] %v449
  %454 = vst [vmem:[#allocation2 + $0x30] sm:$0xff] %v450
  %v455 = vld [vmem:[#allocation2] sm:$0xff]
  %v456 = vld [vmem:[#allocation2 + $0x8] sm:$0xff]
  %v457 = vld [vmem:[#allocation2 + $0x10] sm:$0xff]
  %v458 = vld [vmem:[#allocation2 + $0x18] sm:$0xff]
  %v459 = vld [vmem:[#allocation2 + $0x20] sm:$0xff]
  %v460 = vld [vmem:[#allocation2 + $0x28] sm:$0xff]
  %v461 = vld [vmem:[#allocation2 + $0x30] sm:$0xff]
  %v462 = vld [vmem:[#allocation2 + $0x38] sm:$0xff]
  %v469 = vrot.slane %v455, 7
  %v470 = vrot.slane %v456, 7
  %v471 = vsel %vm55, %v469, %v470
  %v472 = vrot.slane %v457, 7
  %v473 = vsel %vm55, %v470, %v472
  %v474 = vrot.slane %v459, 7
  %v475 = vrot.slane %v460, 7
  %v476 = vsel %vm55, %v474, %v475
  %v477 = vrot.slane %v461, 7
  %v478 = vsel %vm55, %v475, %v477
  %v485 = vrot.slane %v456, 1
  %v486 = vrot.slane %v457, 1
  %v487 = vsel %vm72, %v485, %v486
  %v488 = vrot.slane %v458, 1
  %v489 = vsel %vm72, %v486, %v488
  %v490 = vrot.slane %v460, 1
  %v491 = vrot.slane %v461, 1
  %v492 = vsel %vm72, %v490, %v491
  %v493 = vrot.slane %v462, 1
  %v494 = vsel %vm72, %v491, %v493
  %v499 = vld [vmem:[%s4] sm:$0xff]
  %v500 = vld [vmem:[%s4 + $0x8] sm:$0xff]
  %v501 = vld [vmem:[%s4 + $0x10] sm:$0xff]
  %v502 = vld [vmem:[%s4 + $0x18] sm:$0xff]
  %v503 = vld [vmem:[%s4 + $0x20] sm:$0xff]
  %v504 = vld [vmem:[%s4 + $0x28] sm:$0xff]
  %v505 = vld [vmem:[%s4 + $0x30] sm:$0xff]
  %v506 = vld [vmem:[%s4 + $0x38] sm:$0xff]
  %v507 = vld [vmem:[%s4 + $0x40] sm:$0xff]
  %v508 = vld [vmem:[%s4 + $0x48] sm:$0xff]
  %v509 = vld [vmem:[%s4 + $0x50] sm:$0xff]
  %v510 = vld [vmem:[%s4 + $0x58] sm:$0xff]
  %v511 = vld [vmem:[%s4 + $0x60] sm:$0xff]
  %v512 = vld [vmem:[%s4 + $0x68] sm:$0xff]
  %v513 = vld [vmem:[%s4 + $0x70] sm:$0xff]
  %v514 = vld [vmem:[%s4 + $0x78] sm:$0xff]
  %v515 = vld [vmem:[%s4 + $0x80] sm:$0xff]
  %v516 = vld [vmem:[%s4 + $0x88] sm:$0xff]
  %v517 = vld [vmem:[%s4 + $0x90] sm:$0xff]
  %v518 = vld [vmem:[%s4 + $0x98] sm:$0xff]
  %v519 = vld [vmem:[%s4 + $0xa0] sm:$0xff]
  %v520 = vld [vmem:[%s4 + $0xa8] sm:$0xff]
  %v521 = vld [vmem:[%s4 + $0xb0] sm:$0xff]
  %v522 = vld [vmem:[%s4 + $0xb8] sm:$0xff]
  %v523 = vld [vmem:[%s4 + $0xc0] sm:$0xff]
  %v524 = vld [vmem:[%s4 + $0xc8] sm:$0xff]
  %v525 = vld [vmem:[%s4 + $0xd0] sm:$0xff]
  %v526 = vld [vmem:[%s4 + $0xd8] sm:$0xff]
  %v527 = vld [vmem:[%s4 + $0xe0] sm:$0xff]
  %v528 = vld [vmem:[%s4 + $0xe8] sm:$0xff]
  %v529 = vld [vmem:[%s4 + $0xf0] sm:$0xff]
  %v530 = vld [vmem:[%s4 + $0xf8] sm:$0xff]
  %v531 = vld [vmem:[%s4 + $0x100] sm:$0xff]
  %v532 = vld [vmem:[%s4 + $0x108] sm:$0xff]
  %v533 = vld [vmem:[%s4 + $0x110] sm:$0xff]
  %v534 = vld [vmem:[%s4 + $0x118] sm:$0xff]
  %v535 = vld [vmem:[%s4 + $0x120] sm:$0xff]
  %v536 = vld [vmem:[%s4 + $0x128] sm:$0xff]
  %v537 = vld [vmem:[%s4 + $0x130] sm:$0xff]
  %v538 = vld [vmem:[%s4 + $0x138] sm:$0xff]
  %v539 = vld [vmem:[%s4 + $0x140] sm:$0xff]
  %v540 = vld [vmem:[%s4 + $0x148] sm:$0xff]
  %v541 = vld [vmem:[%s4 + $0x150] sm:$0xff]
  %v542 = vld [vmem:[%s4 + $0x158] sm:$0xff]
  %v543 = vld [vmem:[%s4 + $0x160] sm:$0xff]
  %v544 = vld [vmem:[%s4 + $0x168] sm:$0xff]
  %v545 = vld [vmem:[%s4 + $0x170] sm:$0xff]
  %v546 = vld [vmem:[%s4 + $0x178] sm:$0xff]
  %547 = vmatprep.subr.mxu0 0.0
  %548 = vmatpush1.msra.mxu0 %v499
  %549 = vmatprep.subr.mxu0 0.0
  %550 = vmatpush1.msra.mxu0 %v500
  %551 = vmatprep.subr.mxu0 0.0
  %552 = vmatpush1.msra.mxu0 %v501
  %553 = vmatprep.subr.mxu0 0.0
  %554 = vmatpush1.msra.mxu0 %v502
  %555 = vmatprep.subr.mxu0 0.0
  %556 = vmatpush1.msra.mxu0 %v503
  %557 = vmatprep.subr.mxu0 0.0
  %558 = vmatpush1.msra.mxu0 %v504
  %559 = vmatprep.subr.mxu0 0.0
  %560 = vmatpush1.msra.mxu0 %v505
  %561 = vmatprep.subr.mxu0 0.0
  %562 = vmatpush1.msra.mxu0 %v506
  %563 = vmatprep.subr.mxu0 0.0
  %564 = vmatpush1.msra.mxu0 %v507
  %565 = vmatprep.subr.mxu0 0.0
  %566 = vmatpush1.msra.mxu0 %v508
  %567 = vmatprep.subr.mxu0 0.0
  %568 = vmatpush1.msra.mxu0 %v509
  %569 = vmatprep.subr.mxu0 0.0
  %570 = vmatpush1.msra.mxu0 %v510
  %571 = vmatprep.subr.mxu0 0.0
  %572 = vmatpush1.msra.mxu0 %v511
  %573 = vmatprep.subr.mxu0 0.0
  %574 = vmatpush1.msra.mxu0 %v512
  %575 = vmatprep.subr.mxu0 0.0
  %576 = vmatpush1.msra.mxu0 %v513
  %577 = vmatprep.subr.mxu0 0.0
  %578 = vmatpush1.msra.mxu0 %v514
  %579 = vmatprep.subr.mxu0 0.0
  %580 = vmatpush1.msra.mxu0 %v515
  %581 = vmatprep.subr.mxu0 0.0
  %582 = vmatpush1.msra.mxu0 %v516
  %583 = vmatprep.subr.mxu0 0.0
  %584 = vmatpush1.msra.mxu0 %v517
  %585 = vmatprep.subr.mxu0 0.0
  %586 = vmatpush1.msra.mxu0 %v518
  %587 = vmatprep.subr.mxu0 0.0
  %588 = vmatpush1.msra.mxu0 %v519
  %589 = vmatprep.subr.mxu0 0.0
  %590 = vmatpush1.msra.mxu0 %v520
  %591 = vmatprep.subr.mxu0 0.0
  %592 = vmatpush1.msra.mxu0 %v521
  %593 = vmatprep.subr.mxu0 0.0
  %594 = vmatpush1.msra.mxu0 %v522
  %595 = vmatprep.subr.mxu0 0.0
  %596 = vmatpush1.msra.mxu0 %v523
  %597 = vmatprep.subr.mxu0 0.0
  %598 = vmatpush1.msra.mxu0 %v524
  %599 = vmatprep.subr.mxu0 0.0
  %600 = vmatpush1.msra.mxu0 %v525
  %601 = vmatprep.subr.mxu0 0.0
  %602 = vmatpush1.msra.mxu0 %v526
  %603 = vmatprep.subr.mxu0 0.0
  %604 = vmatpush1.msra.mxu0 %v527
  %605 = vmatprep.subr.mxu0 0.0
  %606 = vmatpush1.msra.mxu0 %v528
  %607 = vmatprep.subr.mxu0 0.0
  %608 = vmatpush1.msra.mxu0 %v529
  %609 = vmatprep.subr.mxu0 0.0
  %610 = vmatpush1.msra.mxu0 %v530
  %611 = vmatprep.mubr.f32.mxu0 %v456
  %612 = vmatmul.mubr.f32.gmra.mrb[0].mxu0 %v471
  %v613 = vpop.f32.mrb[0].mxu0
  %v614 = vadd.f32 0.0, %v613
  %v615 = vpop.f32.mrb[0].mxu0
  %616 = vmatprep.mubr.f32.mxu0 %v457
  %617 = vmatmul.mubr.f32.gmra.mrb[0].mxu0 %v473
  %v618 = vpop.f32.mrb[0].mxu0
  %v619 = vadd.f32 0.0, %v618
  %v620 = vpop.f32.mrb[0].mxu0
  %621 = vmatprep.mubr.f32.mxu0 %v460
  %622 = vmatmul.mubr.f32.gmra.mrb[0].mxu0 %v476
  %v623 = vpop.f32.mrb[0].mxu0
  %v624 = vadd.f32 0.0, %v623
  %v625 = vpop.f32.mrb[0].mxu0
  %626 = vmatprep.mubr.f32.mxu0 %v461
  %627 = vmatmul.mubr.f32.gmra.mrb[0].mxu0 %v478
  %v628 = vpop.f32.mrb[0].mxu0
  %v629 = vadd.f32 0.0, %v628
  %v630 = vpop.f32.mrb[0].mxu0
  %631 = vdwg.mxu0
  %632 = vmatprep.subr.mxu0 0.0
  %633 = vmatpush1.msra.mxu0 %v531
  %634 = vmatprep.subr.mxu0 0.0
  %635 = vmatpush1.msra.mxu0 %v532
  %636 = vmatprep.subr.mxu0 0.0
  %637 = vmatpush1.msra.mxu0 %v533
  %638 = vmatprep.subr.mxu0 0.0
  %639 = vmatpush1.msra.mxu0 %v534
  %640 = vmatprep.subr.mxu0 0.0
  %641 = vmatpush1.msra.mxu0 %v535
  %642 = vmatprep.subr.mxu0 0.0
  %643 = vmatpush1.msra.mxu0 %v536
  %644 = vmatprep.subr.mxu0 0.0
  %645 = vmatpush1.msra.mxu0 %v537
  %646 = vmatprep.subr.mxu0 0.0
  %647 = vmatpush1.msra.mxu0 %v538
  %648 = vmatprep.subr.mxu0 0.0
  %649 = vmatpush1.msra.mxu0 %v539
  %650 = vmatprep.subr.mxu0 0.0
  %651 = vmatpush1.msra.mxu0 %v540
  %652 = vmatprep.subr.mxu0 0.0
  %653 = vmatpush1.msra.mxu0 %v541
  %654 = vmatprep.subr.mxu0 0.0
  %655 = vmatpush1.msra.mxu0 %v542
  %656 = vmatprep.subr.mxu0 0.0
  %657 = vmatpush1.msra.mxu0 %v543
  %658 = vmatprep.subr.mxu0 0.0
  %659 = vmatpush1.msra.mxu0 %v544
  %660 = vmatprep.subr.mxu0 0.0
  %661 = vmatpush1.msra.mxu0 %v545
  %662 = vmatprep.subr.mxu0 0.0
  %663 = vmatpush1.msra.mxu0 %v546
  %664 = vmatprep.subr.mxu0 0.0
  %665 = vmatpush1.msra.mxu0 0.0
  %666 = vmatprep.subr.mxu0 0.0
  %667 = vmatpush1.msra.mxu0 0.0
  %668 = vmatprep.subr.mxu0 0.0
  %669 = vmatpush1.msra.mxu0 0.0
  %670 = vmatprep.subr.mxu0 0.0
  %671 = vmatpush1.msra.mxu0 0.0
  %672 = vmatprep.subr.mxu0 0.0
  %673 = vmatpush1.msra.mxu0 0.0
  %674 = vmatprep.subr.mxu0 0.0
  %675 = vmatpush1.msra.mxu0 0.0
  %676 = vmatprep.subr.mxu0 0.0
  %677 = vmatpush1.msra.mxu0 0.0
  %678 = vmatprep.subr.mxu0 0.0
  %679 = vmatpush1.msra.mxu0 0.0
  %680 = vmatprep.subr.mxu0 0.0
  %681 = vmatpush1.msra.mxu0 0.0
  %682 = vmatprep.subr.mxu0 0.0
  %683 = vmatpush1.msra.mxu0 0.0
  %684 = vmatprep.subr.mxu0 0.0
  %685 = vmatpush1.msra.mxu0 0.0
  %686 = vmatprep.subr.mxu0 0.0
  %687 = vmatpush1.msra.mxu0 0.0
  %688 = vmatprep.subr.mxu0 0.0
  %689 = vmatpush1.msra.mxu0 0.0
  %690 = vmatprep.subr.mxu0 0.0
  %691 = vmatpush1.msra.mxu0 0.0
  %692 = vmatprep.subr.mxu0 0.0
  %693 = vmatpush1.msra.mxu0 0.0
  %694 = vmatprep.subr.mxu0 0.0
  %695 = vmatpush1.msra.mxu0 0.0
  %696 = vmatprep.mubr.f32.mxu0 0.0
  %697 = vmatmul.mubr.f32.gmra.mrb[0].mxu0 %v487
  %v698 = vpop.f32.mrb[0].mxu0
  %v699 = vadd.f32 %v614, %v698
  %v700 = vpop.f32.mrb[0].mxu0
  %701 = vmatprep.mubr.f32.mxu0 0.0
  %702 = vmatmul.mubr.f32.gmra.mrb[0].mxu0 %v489
  %v703 = vpop.f32.mrb[0].mxu0
  %v704 = vadd.f32 %v619, %v703
  %v705 = vpop.f32.mrb[0].mxu0
  %706 = vmatprep.mubr.f32.mxu0 0.0
  %707 = vmatmul.mubr.f32.gmra.mrb[0].mxu0 %v492
  %v708 = vpop.f32.mrb[0].mxu0
  %v709 = vadd.f32 %v624, %v708
  %v710 = vpop.f32.mrb[0].mxu0
  %711 = vmatprep.mubr.f32.mxu0 0.0
  %712 = vmatmul.mubr.f32.gmra.mrb[0].mxu0 %v494
  %v713 = vpop.f32.mrb[0].mxu0
  %v714 = vadd.f32 %v629, %v713
  %v715 = vpop.f32.mrb[0].mxu0
  %716 = vdwg.mxu0
  %v717 = vld [vmem:[%s5] sm:$0x1]
  %v718 = vld [vmem:[%s6] sm:$0x1]
  %v719 = vadd.f32 %v699, %v704
  %v720 = vadd.f32 %v719, %v709
  %v721 = vadd.f32 %v720, %v714
  %v722 = vmul.f32 %v699, %v699
  %v723 = vmul.f32 %v704, %v704
  %v724 = vmul.f32 %v709, %v709
  %v725 = vmul.f32 %v714, %v714
  %v726 = vadd.f32 %v722, %v723
  %v727 = vadd.f32 %v726, %v724
  %v728 = vadd.f32 %v727, %v725
  %v729 = vld [vmem:[%s7] sm:$0xff]
  %v730 = vld [vmem:[%s7 + $0x8] sm:$0xff]
  %v731 = vld [vmem:[%s7 + $0x10] sm:$0xff]
  %v732 = vld [vmem:[%s7 + $0x18] sm:$0xff]
  %v733 = vld [vmem:[%s7 + $0x20] sm:$0xff]
  %v734 = vld [vmem:[%s7 + $0x28] sm:$0xff]
  %v735 = vld [vmem:[%s7 + $0x30] sm:$0xff]
  %v736 = vld [vmem:[%s7 + $0x38] sm:$0xff]
  %v737 = vld [vmem:[%s7 + $0x40] sm:$0xff]
  %v738 = vld [vmem:[%s7 + $0x48] sm:$0xff]
  %v739 = vld [vmem:[%s7 + $0x50] sm:$0xff]
  %v740 = vld [vmem:[%s7 + $0x58] sm:$0xff]
  %v741 = vld [vmem:[%s7 + $0x60] sm:$0xff]
  %v742 = vld [vmem:[%s7 + $0x68] sm:$0xff]
  %v743 = vld [vmem:[%s7 + $0x70] sm:$0xff]
  %v744 = vld [vmem:[%s7 + $0x78] sm:$0xff]
  %745 = vmatprep.subr.mxu0 0.0
  %746 = vmatpush1.msra.mxu0 %v729
  %747 = vmatprep.subr.mxu0 0.0
  %748 = vmatpush1.msra.mxu0 %v730
  %749 = vmatprep.subr.mxu0 0.0
  %750 = vmatpush1.msra.mxu0 %v731
  %751 = vmatprep.subr.mxu0 0.0
  %752 = vmatpush1.msra.mxu0 %v732
  %753 = vmatprep.subr.mxu0 0.0
  %754 = vmatpush1.msra.mxu0 %v733
  %755 = vmatprep.subr.mxu0 0.0
  %756 = vmatpush1.msra.mxu0 %v734
  %757 = vmatprep.subr.mxu0 0.0
  %758 = vmatpush1.msra.mxu0 %v735
  %759 = vmatprep.subr.mxu0 0.0
  %760 = vmatpush1.msra.mxu0 %v736
  %761 = vmatprep.subr.mxu0 0.0
  %762 = vmatpush1.msra.mxu0 %v737
  %763 = vmatprep.subr.mxu0 0.0
  %764 = vmatpush1.msra.mxu0 %v738
  %765 = vmatprep.subr.mxu0 0.0
  %766 = vmatpush1.msra.mxu0 %v739
  %767 = vmatprep.subr.mxu0 0.0
  %768 = vmatpush1.msra.mxu0 %v740
  %769 = vmatprep.subr.mxu0 0.0
  %770 = vmatpush1.msra.mxu0 %v741
  %771 = vmatprep.subr.mxu0 0.0
  %772 = vmatpush1.msra.mxu0 %v742
  %773 = vmatprep.subr.mxu0 0.0
  %774 = vmatpush1.msra.mxu0 %v743
  %775 = vmatprep.subr.mxu0 0.0
  %776 = vmatpush1.msra.mxu0 %v744
  %777 = vmatprep.subr.mxu0 0.0
  %778 = vmatpush1.msra.mxu0 0.0
  %779 = vmatprep.subr.mxu0 0.0
  %780 = vmatpush1.msra.mxu0 0.0
  %781 = vmatprep.subr.mxu0 0.0
  %782 = vmatpush1.msra.mxu0 0.0
  %783 = vmatprep.subr.mxu0 0.0
  %784 = vmatpush1.msra.mxu0 0.0
  %785 = vmatprep.subr.mxu0 0.0
  %786 = vmatpush1.msra.mxu0 0.0
  %787 = vmatprep.subr.mxu0 0.0
  %788 = vmatpush1.msra.mxu0 0.0
  %789 = vmatprep.subr.mxu0 0.0
  %790 = vmatpush1.msra.mxu0 0.0
  %791 = vmatprep.subr.mxu0 0.0
  %792 = vmatpush1.msra.mxu0 0.0
  %793 = vmatprep.subr.mxu0 0.0
  %794 = vmatpush1.msra.mxu0 0.0
  %795 = vmatprep.subr.mxu0 0.0
  %796 = vmatpush1.msra.mxu0 0.0
  %797 = vmatprep.subr.mxu0 0.0
  %798 = vmatpush1.msra.mxu0 0.0
  %799 = vmatprep.subr.mxu0 0.0
  %800 = vmatpush1.msra.mxu0 0.0
  %801 = vmatprep.subr.mxu0 0.0
  %802 = vmatpush1.msra.mxu0 0.0
  %803 = vmatprep.subr.mxu0 0.0
  %804 = vmatpush1.msra.mxu0 0.0
  %805 = vmatprep.subr.mxu0 0.0
  %806 = vmatpush1.msra.mxu0 0.0
  %807 = vmatprep.subr.mxu0 0.0
  %808 = vmatpush1.msra.mxu0 0.0
  %809 = vmatprep.mubr.f32.mxu0 0.0
  %810 = vmatmul.mubr.f32.gmra.mrb[0].mxu0 %v721
  %v811 = vpop.f32.mrb[0].mxu0
  %v812 = vadd.f32 0.0, %v811
  %v813 = vpop.f32.mrb[0].mxu0
  %814 = vmatprep.mubr.f32.mxu0 0.0
  %815 = vmatmul.mubr.f32.gmra.mrb[0].mxu0 %v728
  %v816 = vpop.f32.mrb[0].mxu0
  %v817 = vadd.f32 0.0, %v816
  %v818 = vpop.f32.mrb[0].mxu0
  %819 = vdwg.mxu0
  %v820 = vrot.slane %v812, 4
  %v821 = vadd.f32 %v812, %v820
  %v822 = vrot.slane %v821, 2
  %v823 = vadd.f32 %v821, %v822
  %v824 = vrot.slane %v823, 1
  %v825 = vadd.f32 %v823, %v824
  %v826 = vrot.slane %v817, 4
  %v827 = vadd.f32 %v817, %v826
  %v828 = vrot.slane %v827, 2
  %v829 = vadd.f32 %v827, %v828
  %v830 = vrot.slane %v829, 1
  %v831 = vadd.f32 %v829, %v830
  %v832 = vmul.f32 %v825, %v825
  %v833 = vsub.f32 %v831, %v832
  %v834 = vadd.f32 %v833, 1e-05
  %v835 = vrsqrt.pop %v834
  %v836 = vmul.f32 %v717, %v835
  %v837 = vmul.f32 %v825, %v836
  %v838 = vsub.f32 %v718, %v837
  %v840 = vlaneseq
  %v841 = vshrl.u32 %v840, 7
  %v842 = vsub.s32 0, %v841
  %v843 = vrot.slane %v836, %v842
  %v845 = vmul.f32 %v699, %v843
  %v846 = vmul.f32 %v704, %v843
  %v847 = vmul.f32 %v709, %v843
  %v848 = vmul.f32 %v714, %v843
  %v850 = vlaneseq
  %v851 = vshrl.u32 %v850, 7
  %v852 = vsub.s32 0, %v851
  %v853 = vrot.slane %v838, %v852
  %v855 = vadd.f32 %v845, %v853
  %v856 = vadd.f32 %v846, %v853
  %v857 = vadd.f32 %v847, %v853
  %v858 = vadd.f32 %v848, %v853
  %v859 = vmax.f32 %v855, 0.0
  %v860 = vmax.f32 %v856, 0.0
  %v861 = vmax.f32 %v857, 0.0
  %v862 = vmax.f32 %v858, 0.0
  %v863 = vadd.f32 %v33, %v859
  %v864 = vadd.f32 %v34, %v860
  %v865 = vadd.f32 %v35, %v861
  %v866 = vadd.f32 %v36, %v862
  %867 = vst [vmem:[%s8] sm:$0xff] %v863
  %868 = vst [vmem:[%s8 + $0x8] sm:$0xff] %v864
  %869 = vst [vmem:[%s8 + $0x10] sm:$0xff] %v865
  %870 = vst [vmem:[%s8 + $0x18] sm:$0xff] %v866
  // Predicated region
  $region34: #{residual_block.1} parent=0 // pred_check
    _
  $region35: #{residual_block.1} parent=0 // pred_check_branch
    %872 = sbr.rel (0) target = $region37
  $region36: #{residual_block.1} parent=0 // pred_region
    _
  $region37: #{residual_block.1} parent=0 // pred_fallthru
    _
  // Predicated region
  $region38: #{residual_block.1} parent=0 // pred_check
    _
  $region39: #{residual_block.1} parent=0 // pred_check_branch
    %874 = sbr.rel (0) target = $region41
  $region40: #{residual_block.1} parent=0 // pred_region
    _
  $region41: #{residual_block.1} parent=0 // pred_fallthru
    _

</llo_original>
